<compile_context>
chip_gen: v6e
topology: v6e:2x2x1
jax: 0.10.0
libtpu: 0.0.40
codegen_flags: <defaults>
</compile_context>

<pallas_src>
import jax
import jax.numpy as jnp
from jax.experimental import pallas as pl
from jax.experimental.pallas import tpu as pltpu


def _bce_loss_kernel(idx_ref, p_ref, mask_ref, out_ref):
    # idx_ref: (2,) int32 scalar-prefetch ref (consumed only by the index_maps).
    del idx_ref
    p = p_ref[...].astype(jnp.float32)       # (S, 128)  probabilities[0], packed
    t = mask_ref[...].astype(jnp.float32)    # (S, 128)  bin_mask[i, j], packed
    # Single-log BCE (exact for binary targets):
    #   t == 1 -> -log(p),  t == 0 -> -log(1 - p),  log clamped >= -100
    # (matches torch.nn.BCELoss's clamp on the selected log term).
    p_sel = jnp.where(t > 0.5, p, 1.0 - p)
    per_elem = -jnp.maximum(jnp.log(p_sel), -100.0)
    inv_n = 1.0 / (per_elem.shape[0] * per_elem.shape[1])
    out_ref[...] = jnp.sum(per_elem, keepdims=True) * inv_n      # (1, 1) mean


def custom_loss(fmap_idx, probabilities, bin_mask):
    """Pallas TPU implementation of CustomLoss.forward.

    fmap_idx:       (2,)  int32    -- (i, j) selector into bin_mask
    probabilities:  (B, D) float   -- only row 0 is used (probabilities[0])
    bin_mask:       (I, J, D)      -- binary mask table
    returns:        scalar float32 loss (mean-reduced BCE)
    """
    B, D = probabilities.shape
    I, J, D2 = bin_mask.shape
    assert D == D2, (D, D2)
    assert D % 128 == 0, D
    S = D // 128  # sublane-packed rows per vector (36 for D=4608)

    # Metadata-only, contiguous repacks: last-dim 128 lanes, S full-extent
    # sublanes -> dense vregs inside the kernel.
    p3 = probabilities.reshape(B, S, 128)
    m3 = bin_mask.reshape(I * J, S, 128)
    fmap_idx = fmap_idx.astype(jnp.int32)
    n_rows = I * J

    def p_map(g, idx):
        return (0, 0, 0)                       # always probabilities[0]

    def m_map(g, idx):
        row = idx[0] * J + idx[1]
        row = jnp.minimum(jnp.maximum(row, 0), n_rows - 1)   # range-guard
        return (row, 0, 0)

    grid_spec = pltpu.PrefetchScalarGridSpec(
        num_scalar_prefetch=1,
        grid=(1,),
        in_specs=[
            # probabilities row 0, packed; leading dim squeezed away.
            pl.BlockSpec((None, S, 128), p_map),
            # bin_mask row i*J + j, packed; selected via scalar prefetch.
            pl.BlockSpec((None, S, 128), m_map),
        ],
        out_specs=pl.BlockSpec((1, 1), lambda g, idx: (0, 0)),
    )
    out = pl.pallas_call(
        _bce_loss_kernel,
        out_shape=jax.ShapeDtypeStruct((1, 1), jnp.float32),
        grid_spec=grid_spec,
        compiler_params=pltpu.CompilerParams(
            dimension_semantics=("arbitrary",)),
        cost_estimate=pl.CostEstimate(
            flops=5 * D,                 # cmp/select/sub/neg/max per element
            transcendentals=D,           # one log per element (single-log form)
            bytes_accessed=2 * 4 * D + 4),
    )(fmap_idx, probabilities.astype(jnp.float32).reshape(B, S, 128)
      if False else p3, m3)
    return out[0, 0]


def _reference_loss(fmap_idx, probabilities, bin_mask):
    """Pure-JAX reference mirroring torch.nn.BCELoss semantics (two-term form)."""
    p = probabilities[0].astype(jnp.float32)
    t = bin_mask[fmap_idx[0], fmap_idx[1]].astype(jnp.float32)
    log_p = jnp.maximum(jnp.log(p), -100.0)
    log_1mp = jnp.maximum(jnp.log(1.0 - p), -100.0)
    return jnp.mean(-(t * log_p + (1.0 - t) * log_1mp))


if __name__ == "__main__":
    key = jax.random.PRNGKey(0)
    k_mask, k_prob = jax.random.split(key)

    # Small shapes implied by the forward: probabilities (B, D) from an upstream
    # sigmoid head (D = 4608 matches the companion encoder), bin_mask (I, J, D).
    B, I, J, D = 2, 8, 8, 4608

    bin_mask = (jax.random.uniform(k_mask, (I, J, D)) > 0.5).astype(jnp.float32)
    probabilities = jax.nn.sigmoid(jax.random.normal(k_prob, (B, D), jnp.float32))
    fmap_idx = jnp.array([3, 5], dtype=jnp.int32)

    loss = jax.jit(custom_loss)(fmap_idx, probabilities, bin_mask)
    loss = jax.block_until_ready(loss)

    ref = _reference_loss(fmap_idx, probabilities, bin_mask)
    assert loss.shape == (), loss.shape
    assert bool(jnp.isfinite(loss))
    assert bool(jnp.allclose(loss, ref, rtol=1e-4, atol=1e-6)), (loss, ref)
    print("KERNEL_OK")
</pallas_src>

<mosaic_0001>
module attributes {stable_mosaic.version = 11 : i64} {
  func.func @_bce_loss_kernel(%arg0: i32, %arg1: memref<2xi32, #tpu.memory_space<smem>>, %arg2: memref<1x36x128xf32, #tpu.memory_space<vmem>>, %arg3: memref<1x36x128xf32, #tpu.memory_space<vmem>>, %arg4: memref<1x1xf32, #tpu.memory_space<vmem>>) attributes {dimension_semantics = [#tpu.dimension_semantics<arbitrary>], iteration_bounds = array<i64: 1>, scalar_prefetch = 1 : i64, scratch_operands = 0 : i64, tpu.core_type = #tpu.core_type<tc>, window_params = [{transform_indices = @transform_0, window_bounds = array<i64: 1, 36, 128>}, {transform_indices = @transform_1, window_bounds = array<i64: 1, 36, 128>}, {pipeline_mode = #tpu.pipeline_mode<synchronous>, transform_indices = @transform_2, window_bounds = array<i64: 1, 1>}]} {
    %c0 = arith.constant 0 : index
    %c0_0 = arith.constant 0 : index
    %c0_1 = arith.constant 0 : index
    %0 = vector.load %arg2[%c0, %c0_0, %c0_1] : memref<1x36x128xf32, #tpu.memory_space<vmem>>, vector<1x36x128xf32>
    %1 = vector.shape_cast %0 : vector<1x36x128xf32> to vector<36x128xf32>
    %c0_2 = arith.constant 0 : index
    %c0_3 = arith.constant 0 : index
    %c0_4 = arith.constant 0 : index
    %2 = vector.load %arg3[%c0_2, %c0_3, %c0_4] : memref<1x36x128xf32, #tpu.memory_space<vmem>>, vector<1x36x128xf32>
    %3 = vector.shape_cast %2 : vector<1x36x128xf32> to vector<36x128xf32>
    %cst = arith.constant 5.000000e-01 : f32
    %4 = vector.broadcast %cst : f32 to vector<36x128xf32>
    %5 = arith.cmpf ogt, %3, %4 : vector<36x128xf32>
    %cst_5 = arith.constant 1.000000e+00 : f32
    %6 = vector.broadcast %cst_5 : f32 to vector<36x128xf32>
    %7 = arith.subf %6, %1 : vector<36x128xf32>
    %8 = arith.select %5, %1, %7 : vector<36x128xi1>, vector<36x128xf32>
    %9 = math.log %8 : vector<36x128xf32>
    %cst_6 = arith.constant -1.000000e+02 : f32
    %10 = vector.broadcast %cst_6 : f32 to vector<36x128xf32>
    %11 = arith.maximumf %9, %10 : vector<36x128xf32>
    %cst_7 = arith.constant 0.000000e+00 : f32
    %12 = vector.broadcast %cst_7 : f32 to vector<36x128xf32>
    %13 = arith.subf %12, %11 : vector<36x128xf32>
    %14 = vector.shape_cast %13 : vector<36x128xf32> to vector<1x36x128xf32>
    %cst_8 = arith.constant dense<0.000000e+00> : vector<1xf32>
    %15 = vector.multi_reduction <add>, %14, %cst_8 [1, 2] : vector<1x36x128xf32> to vector<1xf32>
    %16 = vector.shape_cast %15 : vector<1xf32> to vector<1x1x1xf32>
    %17 = vector.extract %16[0, 0, 0] : f32 from vector<1x1x1xf32>
    %18 = vector.broadcast %17 : f32 to vector<1x1xf32>
    %cst_9 = arith.constant 2.17013891E-4 : f32
    %19 = vector.broadcast %cst_9 : f32 to vector<1x1xf32>
    %20 = arith.mulf %18, %19 : vector<1x1xf32>
    %c0_10 = arith.constant 0 : index
    %c0_11 = arith.constant 0 : index
    %21 = vector.load %arg4[%c0_10, %c0_11] : memref<1x1xf32, #tpu.memory_space<vmem>>, vector<1x1xf32>
    tpu.vector_store %arg4[%c0_10, %c0_11], %20 {strides = array<i32>} : memref<1x1xf32, #tpu.memory_space<vmem>>, vector<1x1xf32>,
    return
  }
  func.func @transform_0(%arg0: i32, %arg1: memref<2xi32, #tpu.memory_space<smem>>) -> (i32, i32, i32) {
    %c0_i32 = arith.constant 0 : i32
    %c0_i32_0 = arith.constant 0 : i32
    %c0_i32_1 = arith.constant 0 : i32
    %c0_i32_2 = arith.constant 0 : i32
    return %c0_i32, %c0_i32_0, %c0_i32_1 : i32, i32, i32
  }
  func.func @transform_1(%arg0: i32, %arg1: memref<2xi32, #tpu.memory_space<smem>>) -> (i32, i32, i32) {
    %c0 = arith.constant 0 : index
    %0 = memref.load %arg1[%c0] : memref<2xi32, #tpu.memory_space<smem>>
    %c8_i32 = arith.constant 8 : i32
    %1 = arith.muli %0, %c8_i32 : i32
    %c1 = arith.constant 1 : index
    %2 = memref.load %arg1[%c1] : memref<2xi32, #tpu.memory_space<smem>>
    %3 = arith.addi %1, %2 : i32
    %c0_i32 = arith.constant 0 : i32
    %4 = arith.maxsi %3, %c0_i32 : i32
    %c63_i32 = arith.constant 63 : i32
    %5 = arith.minsi %4, %c63_i32 : i32
    %c0_i32_0 = arith.constant 0 : i32
    %c0_i32_1 = arith.constant 0 : i32
    %c0_i32_2 = arith.constant 0 : i32
    return %5, %c0_i32_0, %c0_i32_1 : i32, i32, i32
  }
  func.func @transform_2(%arg0: i32, %arg1: memref<2xi32, #tpu.memory_space<smem>>) -> (i32, i32) {
    %c0_i32 = arith.constant 0 : i32
    %c0_i32_0 = arith.constant 0 : i32
    %c0_i32_1 = arith.constant 0 : i32
    return %c0_i32, %c0_i32_0 : i32, i32
  }
}

</mosaic_0001>

<llo_original>
// kernel: custom_loss.1
$region0: #{custom_loss.1}
  #allocation0 [shape = 'u32[]', space=smem, size = 0x4, offset = 0x4, fixed_abs, tag = 'smem constant byte address 0x4 - core index']
  #allocation1 [shape = 'u32[144,128]{1,0:T(1,128)}', space=vmem, size = 0x12000, scoped, tag = 'internal scratch']
  #allocation2 [shape = 's32[1]{0}', space=sflag, size = 0x4, scoped, tag = 'scoped memory for custom_loss.1']
  #allocation3 [shape = 'u8[512]{0}', space=smem, size = 0x200, scoped, tag = 'prefetched SMEM operand 0']
  %s0 = inlined_call_operand.vmem [shape: s32[2], index: 0, kind: input, shape index: {}]
  %s1 = inlined_call_operand.vmem [shape: f32[2,36,128], index: 1, kind: input, shape index: {}]
  %s2 = inlined_call_operand.vmem [shape: f32[64,36,128], index: 2, kind: input, shape index: {}]
  %s3 = inlined_call_operand.hbm [shape: f32[1,1], index: 3, kind: output, shape index: {}]
  %s4 = sld [smem:[#allocation0]]
  $region18: #{custom_loss.1} parent=0
    _
  %s6 = ssub.s32 1, %s4
  %s7 = scalar_select 0, %s6, %s4
  %s8 = sshll.u32 %s0, 4
  %s9 = int_to_ptr.vmem [resolvable:$true] %s8
  %11 = dma.vmem_to_smem %s9, 16, [#allocation3], [#allocation2]
  %12 = dma.done [#allocation2], 16
  %13 = sfence
  $region1: #{custom_loss.1} parent=0
    #allocation4 [shape = 'u8[512]{0}', space=vmem, size = 0x400, scoped, tag = 'output window, operand 0, single buffered']
    #allocation5 [shape = 's32[1]{0}', space=sflag, size = 0x4, scoped, tag = 'scoped memory for custom_loss.1']
    %14 = vsyncpa [#allocation5], 0
    // Predicated region
    $region2: #{custom_loss.1} parent=1 // pred_check
      _
    $region3: #{custom_loss.1} parent=1 // pred_check_branch
      %16 = sbr.rel (0) target = $region5
    $region4: #{custom_loss.1} parent=1 // pred_region
      _
    $region5: #{custom_loss.1} parent=1 // pred_fallthru
      _
    // Predicated region
    $region6: #{custom_loss.1} parent=1 // pred_check
      _
    $region7: #{custom_loss.1} parent=1 // pred_check_branch
      %18 = sbr.rel (0) target = $region9
    $region8: #{custom_loss.1} parent=1 // pred_region
      %s19 = sld [smem:[#allocation3]]
      %s20 = smul.u32 %s19, 8
      %s21 = sld [smem:[#allocation3 + $0x1]]
      %s22 = sadd.s32 %s20, %s21
      %p23 = scmp.gt.s32.totalorder %s22, 0
      %s24 = scalar_select %p23, %s22, 0
      %p25 = scmp.lt.s32.totalorder %s24, 63
      %s26 = scalar_select %p25, %s24, 63
      %p27 = scmp.lt.s32.totalorder %s26, 63
      %s28 = scalar_select %p27, %s26, 63
      %s29 = smul.addr %s28, 5
      %s30 = smul.addr %s29, 8
      %s31 = scalar_lea.vmem %s2, %s30
      %s32 = sld [smem:[#allocation3]]
      %s33 = smul.u32 %s32, 8
      %s34 = sld [smem:[#allocation3 + $0x1]]
      %s35 = sadd.s32 %s33, %s34
      %p36 = scmp.gt.s32.totalorder %s35, 0
      %s37 = scalar_select %p36, %s35, 0
      %p38 = scmp.lt.s32.totalorder %s37, 63
      %s39 = scalar_select %p38, %s37, 63
    $region9: #{custom_loss.1} parent=1 // pred_fallthru
      _
    %s40 = sld [smem:[#allocation3]]
    %s41 = smul.u32 %s40, 8
    %s42 = sld [smem:[#allocation3 + $0x1]]
    %s43 = sadd.s32 %s41, %s42
    %p44 = scmp.gt.s32.totalorder %s43, 0
    %s45 = scalar_select %p44, %s43, 0
    %p46 = scmp.lt.s32.totalorder %s45, 63
    %s47 = scalar_select %p46, %s45, 63
    %p48 = scmp.lt.s32.totalorder %s47, 63
    %s49 = scalar_select %p48, %s47, 63
    %s50 = smul.addr %s49, 5
    %s51 = smul.addr %s50, 8
    %s52 = scalar_lea.vmem %s2, %s51
    %s53 = sld [smem:[#allocation3]]
    %s54 = smul.u32 %s53, 8
    %s55 = sld [smem:[#allocation3 + $0x1]]
    %s56 = sadd.s32 %s54, %s55
    %p57 = scmp.gt.s32.totalorder %s56, 0
    %s58 = scalar_select %p57, %s56, 0
    %p59 = scmp.lt.s32.totalorder %s58, 63
    %s60 = scalar_select %p59, %s58, 63
    %p61 = scmp.lt.s32.totalorder %s60, 63
    %s62 = scalar_select %p61, %s60, 63
    %s63 = smul.addr %s62, 5
    %s64 = smul.addr %s63, 8
    %s65 = scalar_lea.vmem %s2, %s64
    %s66 = sld [smem:[#allocation3]]
    %s67 = smul.u32 %s66, 8
    %s68 = sld [smem:[#allocation3 + $0x1]]
    %s69 = sadd.s32 %s67, %s68
    %p70 = scmp.gt.s32.totalorder %s69, 0
    %s71 = scalar_select %p70, %s69, 0
    %p72 = scmp.lt.s32.totalorder %s71, 63
    %s73 = scalar_select %p72, %s71, 63
    %v74 = vld [vmem:[%s1] sm:$0xff]
    %v75 = vld [vmem:[%s1 + $0x8] sm:$0xff]
    %v76 = vld [vmem:[%s1 + $0x10] sm:$0xff]
    %v77 = vld [vmem:[%s1 + $0x18] sm:$0xff]
    %v78 = vld [vmem:[%s1 + $0x20] sm:$0xf]
    %v79 = vld [vmem:[%s65] sm:$0xff]
    %v80 = vld [vmem:[%s65 + $0x8] sm:$0xff]
    %v81 = vld [vmem:[%s65 + $0x10] sm:$0xff]
    %v82 = vld [vmem:[%s65 + $0x18] sm:$0xff]
    %v83 = vld [vmem:[%s65 + $0x20] sm:$0xf]
    %vm84 = vcmp.gt.f32.partialorder %v79, 0.5
    %vm85 = vcmp.gt.f32.partialorder %v80, 0.5
    %vm86 = vcmp.gt.f32.partialorder %v81, 0.5
    %vm87 = vcmp.gt.f32.partialorder %v82, 0.5
    %vm88 = vcmp.gt.f32.partialorder %v83, 0.5
    %v89 = vsub.f32 1.0, %v74
    %v90 = vsub.f32 1.0, %v75
    %v91 = vsub.f32 1.0, %v76
    %v92 = vsub.f32 1.0, %v77
    %v93 = vsub.f32 1.0, %v78
    %v94 = vsel %vm84, %v74, %v89
    %v95 = vsel %vm85, %v75, %v90
    %v96 = vsel %vm86, %v76, %v91
    %v97 = vsel %vm87, %v77, %v92
    %v98 = vsel %vm88, %v78, %v93
    %v99 = vlog2.pop %v94
    %v100 = vmul.f32 %v99, 0.6931472
    %v101 = vlog2.pop %v95
    %v102 = vmul.f32 %v101, 0.6931472
    %v103 = vlog2.pop %v96
    %v104 = vmul.f32 %v103, 0.6931472
    %v105 = vlog2.pop %v97
    %v106 = vmul.f32 %v105, 0.6931472
    %v107 = vlog2.pop %v98
    %v108 = vmul.f32 %v107, 0.6931472
    %v109 = vmax.f32 %v100, -100.0
    %v110 = vmax.f32 %v102, -100.0
    %v111 = vmax.f32 %v104, -100.0
    %v112 = vmax.f32 %v106, -100.0
    %v113 = vmax.f32 %v108, -100.0
    %v114 = vsub.f32 0.0, %v109
    %v115 = vsub.f32 0.0, %v110
    %v116 = vsub.f32 0.0, %v111
    %v117 = vsub.f32 0.0, %v112
    %v118 = vsub.f32 0.0, %v113
    %v119 = vadd.f32 %v114, %v115
    %v120 = vadd.f32 %v119, %v116
    %v121 = vadd.f32 %v120, %v117
    %vm122 = vcmask 1043456
    %v123 = vsel %vm122, %v118, 0.0
    %v124 = vadd.f32 %v121, %v123
    %125 = vadd.xlane.f32.xlu0 %v124
    %v126 = vpop.xlane.xlu0 %125
    %v127 = vrot.slane %v126, 4
    %v128 = vadd.f32 %v126, %v127
    %v129 = vrot.slane %v128, 2
    %v130 = vadd.f32 %v128, %v129
    %v131 = vrot.slane %v130, 1
    %v132 = vadd.f32 %v130, %v131
    %s133 = vtos %v132
    %v134 = vstv %s133
    %v135 = vmul.f32 %v134, 0.00021701389
    %vm136 = vcmask 0
    %137 = vst.msk [vmem:[#allocation4] sm:$0x1] %vm136, %v135
    // Predicated region
    $region10: #{custom_loss.1} parent=1 // pred_check
      _
    $region11: #{custom_loss.1} parent=1 // pred_check_branch
      %139 = sbr.rel (0) target = $region13
    $region12: #{custom_loss.1} parent=1 // pred_region
      %s141 = ssub.s32 16, 16
      %142 = vsyncadd [#allocation5], %s141
      %s144 = sshll.u32 [#allocation4], 4
      %s145 = int_to_ptr.vmem [resolvable:$true] %s144
      %147 = dma.vmem_to_hbm [thread:$0]  %s145, 16, %s3, [#allocation5]
    $region13: #{custom_loss.1} parent=1 // pred_fallthru
      _
    // Predicated region
    $region14: #{custom_loss.1} parent=1 // pred_check
      _
    $region15: #{custom_loss.1} parent=1 // pred_check_branch
      %149 = sbr.rel (0) target = $region17
    $region16: #{custom_loss.1} parent=1 // pred_region
      %150 = dma.done [#allocation5], 16
    $region17: #{custom_loss.1} parent=1 // pred_fallthru
      _
    %151 = vsyncpa [#allocation5], 1

</llo_original>
